<compile_context>
chip_gen: v7x
topology: tpu7x:2x2x1
jax: 0.10.0
libtpu: 0.0.40
codegen_flags: <defaults>
</compile_context>

<pallas_src>
import functools

import jax
import jax.numpy as jnp
from jax.experimental import pallas as pl
from jax.experimental.pallas import tpu as pltpu


# ----------------------------------------------------------------------------
# helpers
# ----------------------------------------------------------------------------

def _round_up(x, m):
    return ((x + m - 1) // m) * m


def _erf_f32(x):
    # Exact-ish f32 erf (XLA/Eigen rational approx); only used when
    # use_exact_gelu=True and bit-faithfulness to torch's erf-GELU matters.
    x = jnp.clip(x, -4.0, 4.0)
    x2 = x * x
    a = jnp.float32(-2.72614225801306e-10)
    a = a * x2 + jnp.float32(2.77068142495902e-08)
    a = a * x2 + jnp.float32(-2.10102402082508e-06)
    a = a * x2 + jnp.float32(-5.69250639462346e-05)
    a = a * x2 + jnp.float32(-7.34990630326855e-04)
    a = a * x2 + jnp.float32(-2.95459980854025e-03)
    a = a * x2 + jnp.float32(-1.60960333262415e-02)
    p = x * a
    q = jnp.float32(-1.45660718464996e-05)
    q = q * x2 + jnp.float32(-2.13374055278905e-04)
    q = q * x2 + jnp.float32(-1.68282697438203e-03)
    q = q * x2 + jnp.float32(-7.37332916720468e-03)
    q = q * x2 + jnp.float32(-1.42647390514189e-02)
    return p / q


# ----------------------------------------------------------------------------
# fused forward kernel
# ----------------------------------------------------------------------------

def dqn_kernel(x_ref, w1_ref, b1_ref, g_ref, be_ref, w2_ref, b2_ref,
               wqv_ref, bqv_ref, out_ref, *, h_dim, action_dim, use_exact_gelu):
    """x:(TB,Din) -> Linear+ReLU -> LN -> Linear+GELU -> fused q/v/mean -> dueling."""
    # ---- body: Linear(obs_dim, h_dim) + ReLU (bf16 MXU inputs, f32 accumulate) --
    x = x_ref[...].astype(jnp.bfloat16)
    h = jnp.dot(x, w1_ref[...], preferred_element_type=jnp.float32) + b1_ref[...]
    h = jnp.maximum(h, jnp.float32(0.0))       # pad lanes stay exactly 0

    # ---- DuelingHead.body: LayerNorm over the real h_dim lanes ------------------
    # Pad lanes of h are exactly 0 (zero-padded w1/b1 + ReLU), so plain sums over
    # the padded tile equal sums over the real lanes: no iota/mask needed.
    inv_n = jnp.float32(1.0 / h_dim)
    mean = jnp.sum(h, axis=-1, keepdims=True) * inv_n
    ex2 = jnp.sum(h * h, axis=-1, keepdims=True) * inv_n
    var = jnp.maximum(ex2 - mean * mean, jnp.float32(0.0))
    hn = (h - mean) * jax.lax.rsqrt(var + jnp.float32(1e-5))
    hn = hn * g_ref[...] + be_ref[...]          # gamma/beta pads = 0 -> pads back to 0

    # ---- Linear(h_dim, h_dim) + GELU --------------------------------------------
    z = jnp.dot(hn.astype(jnp.bfloat16), w2_ref[...],
                preferred_element_type=jnp.float32) + b2_ref[...]
    if use_exact_gelu:
        ge = jnp.float32(0.5) * z * (jnp.float32(1.0)
                                     + _erf_f32(z * jnp.float32(0.7071067811865475)))
    else:
        # tanh-approx GELU: transcendental runs on the EUP slot (effectively free).
        inner = jnp.float32(0.7978845608028654) * (z + jnp.float32(0.044715) * z * z * z)
        ge = jnp.float32(0.5) * z * (jnp.float32(1.0) + jnp.tanh(inner))

    # ---- fused q / v / q-mean matmul (lane-dense, 128-padded) + dueling ---------
    # wqv columns: [0, A) = q, A = v, A+1 = (1/A) * sum(q columns)  (rest zero)
    qv = jnp.dot(ge.astype(jnp.bfloat16), wqv_ref[...],
                 preferred_element_type=jnp.float32) + bqv_ref[...]
    v = qv[:, action_dim:action_dim + 1]              # static slices
    qmean = qv[:, action_dim + 1:action_dim + 2]
    out_ref[...] = qv + (v - qmean)    # only lanes [0, action_dim) are meaningful


# ----------------------------------------------------------------------------
# wrapper
# ----------------------------------------------------------------------------

_TB_MAX = 512    # bounded batch tile: VMEM-independent of B, >=2 grid steps for B>512


def dqn_forward(x, pp, *, use_exact_gelu=False):
    """Returns the lane-dense padded (B_pad, OUT_PAD) Q array.

    Only rows [:B] and lanes [:action_dim] are meaningful; consume/slice lazily
    downstream (argmax / TD-target math) instead of paying an extra slice kernel
    on the hot path.
    """
    B, D = x.shape
    H_PAD, OUT_PAD = pp["H_PAD"], pp["OUT_PAD"]
    A, H = pp["action_dim"], pp["h_dim"]

    if B <= _TB_MAX:
        TB = B                              # single whole-array block, no padding
        grid = (1,)
        B_pad = B
    else:
        TB = _TB_MAX
        n = pl.cdiv(B, TB)
        grid = (n,)
        B_pad = n * TB
        if B_pad != B:
            x = jnp.pad(x, ((0, B_pad - B), (0, 0)))

    def full(shape):
        return pl.BlockSpec(shape, lambda i: (0, 0))

    out = pl.pallas_call(
        functools.partial(dqn_kernel, h_dim=H, action_dim=A,
                          use_exact_gelu=use_exact_gelu),
        out_shape=jax.ShapeDtypeStruct((B_pad, OUT_PAD), jnp.float32),
        grid=grid,
        in_specs=[pl.BlockSpec((TB, D), lambda i: (i, 0)),
                  full((D, H_PAD)), full((1, H_PAD)),
                  full((1, H_PAD)), full((1, H_PAD)),
                  full((H_PAD, H_PAD)), full((1, H_PAD)),
                  full((H_PAD, OUT_PAD)), full((1, OUT_PAD))],
        out_specs=pl.BlockSpec((TB, OUT_PAD), lambda i: (i, 0)),
        compiler_params=pltpu.CompilerParams(
            dimension_semantics=("parallel",)),
    )(x, pp["w1"], pp["b1"], pp["g"], pp["be"], pp["w2"], pp["b2"],
      pp["wqv"], pp["bqv"])
    return out


# ----------------------------------------------------------------------------
# deterministic parameter init + one-time layout preparation
# ----------------------------------------------------------------------------

def _trunc(key, shape, std):
    return std * jax.random.truncated_normal(key, -2.0, 2.0, shape, jnp.float32)


def init_raw_params(key, obs_dim, action_dim, h_dim=120):
    # layer_init_truncated: truncated-normal weights (std ~ 1/sqrt(fan_in)), zero bias.
    ks = jax.random.split(key, 4)
    return {
        "body_w": _trunc(ks[0], (h_dim, obs_dim), (1.0 / obs_dim) ** 0.5),
        "body_b": jnp.zeros((h_dim,), jnp.float32),
        "ln_g": jnp.ones((h_dim,), jnp.float32),
        "ln_b": jnp.zeros((h_dim,), jnp.float32),
        "proj_w": _trunc(ks[1], (h_dim, h_dim), (1.0 / h_dim) ** 0.5),
        "proj_b": jnp.zeros((h_dim,), jnp.float32),
        "q_w": _trunc(ks[2], (action_dim, h_dim), (1.0 / h_dim) ** 0.5),
        "q_b": jnp.zeros((action_dim,), jnp.float32),
        "v_w": _trunc(ks[3], (1, h_dim), (1.0 / h_dim) ** 0.5),
        "v_b": jnp.zeros((1,), jnp.float32),
    }


def prepare_params(raw, obs_dim, action_dim, h_dim):
    """One-time transpose / pad / cast so no per-call XLA layout ops remain."""
    H_PAD = _round_up(h_dim, 128)
    OUT_PAD = _round_up(action_dim + 2, 128)   # q (A) + v (1) + q-mean (1)

    def pad2(a, rows, cols):
        return jnp.pad(a, ((0, rows - a.shape[0]), (0, cols - a.shape[1])))

    w1 = pad2(raw["body_w"].T, obs_dim, H_PAD).astype(jnp.bfloat16)
    b1 = pad2(raw["body_b"].reshape(1, -1), 1, H_PAD)
    g = pad2(raw["ln_g"].reshape(1, -1), 1, H_PAD)       # pad gamma with 0
    be = pad2(raw["ln_b"].reshape(1, -1), 1, H_PAD)
    w2 = pad2(raw["proj_w"].T, H_PAD, H_PAD).astype(jnp.bfloat16)
    b2 = pad2(raw["proj_b"].reshape(1, -1), 1, H_PAD)

    # fused q/v/mean weight: cols [0,A)=q, col A=v, col A+1=(1/A)*sum(q cols), rest 0
    qwT = raw["q_w"].T                                     # (h_dim, A)
    wqv = jnp.zeros((H_PAD, OUT_PAD), jnp.float32)
    wqv = wqv.at[:h_dim, :action_dim].set(qwT)
    wqv = wqv.at[:h_dim, action_dim].set(raw["v_w"].reshape(-1))
    wqv = wqv.at[:h_dim, action_dim + 1].set(jnp.mean(qwT, axis=1))
    bqv = jnp.zeros((1, OUT_PAD), jnp.float32)
    bqv = bqv.at[0, :action_dim].set(raw["q_b"])
    bqv = bqv.at[0, action_dim].set(raw["v_b"][0])
    bqv = bqv.at[0, action_dim + 1].set(jnp.mean(raw["q_b"]))

    return dict(w1=w1, b1=b1, g=g, be=be, w2=w2, b2=b2,
                wqv=wqv.astype(jnp.bfloat16), bqv=bqv,
                obs_dim=obs_dim, action_dim=action_dim, h_dim=h_dim,
                H_PAD=H_PAD, OUT_PAD=OUT_PAD)


# ----------------------------------------------------------------------------

if __name__ == "__main__":
    key = jax.random.PRNGKey(0)
    batch, obs_dim, action_dim, h_dim = 2, 16, 6, 120   # module default h_dim=120

    raw = init_raw_params(key, obs_dim, action_dim, h_dim)
    pp = prepare_params(raw, obs_dim, action_dim, h_dim)

    # --- tiny-batch (single-block) path ---
    x = jax.random.normal(jax.random.fold_in(key, 123), (batch, obs_dim), jnp.float32)
    fwd = jax.jit(lambda xx: dqn_forward(xx, pp))
    q_pad = fwd(x)
    jax.block_until_ready(q_pad)
    q = q_pad[:batch, :action_dim]          # test-only slice (not on the hot path)
    assert q.shape == (batch, action_dim), q.shape
    assert bool(jnp.all(jnp.isfinite(q)))

    # --- large ragged-batch (cdiv-tiled, padded) path ---
    Bbig = 1100
    xb = jax.random.normal(jax.random.fold_in(key, 456), (Bbig, obs_dim), jnp.float32)
    qb_pad = jax.jit(lambda xx: dqn_forward(xx, pp))(xb)
    jax.block_until_ready(qb_pad)
    qb = qb_pad[:Bbig, :action_dim]
    assert qb.shape == (Bbig, action_dim), qb.shape
    assert bool(jnp.all(jnp.isfinite(qb)))

    print("KERNEL_OK")
</pallas_src>

<mosaic_0001>
module attributes {stable_mosaic.version = 11 : i64} {
  func.func @dqn_kernel(%arg0: i32, %arg1: memref<2x16xf32, #tpu.memory_space<vmem>>, %arg2: memref<16x128xbf16, #tpu.memory_space<vmem>>, %arg3: memref<1x128xf32, #tpu.memory_space<vmem>>, %arg4: memref<1x128xf32, #tpu.memory_space<vmem>>, %arg5: memref<1x128xf32, #tpu.memory_space<vmem>>, %arg6: memref<128x128xbf16, #tpu.memory_space<vmem>>, %arg7: memref<1x128xf32, #tpu.memory_space<vmem>>, %arg8: memref<128x128xbf16, #tpu.memory_space<vmem>>, %arg9: memref<1x128xf32, #tpu.memory_space<vmem>>, %arg10: memref<2x128xf32, #tpu.memory_space<vmem>>) attributes {dimension_semantics = [#tpu.dimension_semantics<parallel>], iteration_bounds = array<i64: 1>, scalar_prefetch = 0 : i64, scratch_operands = 0 : i64, tpu.core_type = #tpu.core_type<tc>, window_params = [{transform_indices = @transform_0, window_bounds = array<i64: 2, 16>}, {pipeline_mode = #tpu.pipeline_mode<synchronous>, transform_indices = @transform_1, window_bounds = array<i64: 16, 128>}, {pipeline_mode = #tpu.pipeline_mode<synchronous>, transform_indices = @transform_2, window_bounds = array<i64: 1, 128>}, {pipeline_mode = #tpu.pipeline_mode<synchronous>, transform_indices = @transform_3, window_bounds = array<i64: 1, 128>}, {pipeline_mode = #tpu.pipeline_mode<synchronous>, transform_indices = @transform_4, window_bounds = array<i64: 1, 128>}, {pipeline_mode = #tpu.pipeline_mode<synchronous>, transform_indices = @transform_5, window_bounds = array<i64: 128, 128>}, {pipeline_mode = #tpu.pipeline_mode<synchronous>, transform_indices = @transform_6, window_bounds = array<i64: 1, 128>}, {pipeline_mode = #tpu.pipeline_mode<synchronous>, transform_indices = @transform_7, window_bounds = array<i64: 128, 128>}, {pipeline_mode = #tpu.pipeline_mode<synchronous>, transform_indices = @transform_8, window_bounds = array<i64: 1, 128>}, {transform_indices = @transform_9, window_bounds = array<i64: 2, 128>}]} {
    %c0 = arith.constant 0 : index
    %c0_0 = arith.constant 0 : index
    %0 = vector.load %arg1[%c0, %c0_0] : memref<2x16xf32, #tpu.memory_space<vmem>>, vector<2x16xf32>
    %1 = arith.truncf %0 : vector<2x16xf32> to vector<2x16xbf16>
    %c0_1 = arith.constant 0 : index
    %c0_2 = arith.constant 0 : index
    %2 = vector.load %arg2[%c0_1, %c0_2] : memref<16x128xbf16, #tpu.memory_space<vmem>>, vector<16x128xbf16>
    %cst = arith.constant dense<0.000000e+00> : vector<2x128xf32>
    %3 = tpu.matmul %1, %2, %cst {dimension_numbers = #tpu.dot_dimension_numbers<[1], [0], [0], [1], [0, 0, 1, 1], [], []>} : vector<2x16xbf16>, vector<16x128xbf16>, vector<2x128xf32> -> vector<2x128xf32>
    %c0_3 = arith.constant 0 : index
    %c0_4 = arith.constant 0 : index
    %4 = vector.load %arg3[%c0_3, %c0_4] : memref<1x128xf32, #tpu.memory_space<vmem>>, vector<1x128xf32>
    %5 = vector.broadcast %4 : vector<1x128xf32> to vector<2x128xf32>
    %6 = arith.addf %3, %5 : vector<2x128xf32>
    %cst_5 = arith.constant 0.000000e+00 : f32
    %7 = vector.broadcast %cst_5 : f32 to vector<2x128xf32>
    %8 = arith.maximumf %6, %7 : vector<2x128xf32>
    %cst_6 = arith.constant dense<0.000000e+00> : vector<2xf32>
    %9 = vector.multi_reduction <add>, %8, %cst_6 [1] : vector<2x128xf32> to vector<2xf32>
    %10 = vector.shape_cast %9 : vector<2xf32> to vector<2x1xf32>
    %cst_7 = arith.constant 0.00833333377 : f32
    %11 = vector.broadcast %cst_7 : f32 to vector<2x1xf32>
    %12 = arith.mulf %10, %11 : vector<2x1xf32>
    %13 = arith.mulf %8, %8 : vector<2x128xf32>
    %cst_8 = arith.constant dense<0.000000e+00> : vector<2xf32>
    %14 = vector.multi_reduction <add>, %13, %cst_8 [1] : vector<2x128xf32> to vector<2xf32>
    %15 = vector.shape_cast %14 : vector<2xf32> to vector<2x1xf32>
    %cst_9 = arith.constant 0.00833333377 : f32
    %16 = vector.broadcast %cst_9 : f32 to vector<2x1xf32>
    %17 = arith.mulf %15, %16 : vector<2x1xf32>
    %18 = arith.mulf %12, %12 : vector<2x1xf32>
    %19 = arith.subf %17, %18 : vector<2x1xf32>
    %cst_10 = arith.constant 0.000000e+00 : f32
    %20 = vector.broadcast %cst_10 : f32 to vector<2x1xf32>
    %21 = arith.maximumf %19, %20 : vector<2x1xf32>
    %22 = vector.broadcast %12 : vector<2x1xf32> to vector<2x128xf32>
    %23 = arith.subf %8, %22 : vector<2x128xf32>
    %cst_11 = arith.constant 9.99999974E-6 : f32
    %24 = vector.broadcast %cst_11 : f32 to vector<2x1xf32>
    %25 = arith.addf %21, %24 : vector<2x1xf32>
    %26 = math.rsqrt %25 : vector<2x1xf32>
    %27 = vector.broadcast %26 : vector<2x1xf32> to vector<2x128xf32>
    %28 = arith.mulf %23, %27 : vector<2x128xf32>
    %c0_12 = arith.constant 0 : index
    %c0_13 = arith.constant 0 : index
    %29 = vector.load %arg4[%c0_12, %c0_13] : memref<1x128xf32, #tpu.memory_space<vmem>>, vector<1x128xf32>
    %30 = vector.broadcast %29 : vector<1x128xf32> to vector<2x128xf32>
    %31 = arith.mulf %28, %30 : vector<2x128xf32>
    %c0_14 = arith.constant 0 : index
    %c0_15 = arith.constant 0 : index
    %32 = vector.load %arg5[%c0_14, %c0_15] : memref<1x128xf32, #tpu.memory_space<vmem>>, vector<1x128xf32>
    %33 = vector.broadcast %32 : vector<1x128xf32> to vector<2x128xf32>
    %34 = arith.addf %31, %33 : vector<2x128xf32>
    %35 = arith.truncf %34 : vector<2x128xf32> to vector<2x128xbf16>
    %c0_16 = arith.constant 0 : index
    %c0_17 = arith.constant 0 : index
    %36 = vector.load %arg6[%c0_16, %c0_17] : memref<128x128xbf16, #tpu.memory_space<vmem>>, vector<128x128xbf16>
    %cst_18 = arith.constant dense<0.000000e+00> : vector<2x128xf32>
    %37 = tpu.matmul %35, %36, %cst_18 {dimension_numbers = #tpu.dot_dimension_numbers<[1], [0], [0], [1], [0, 0, 1, 1], [], []>} : vector<2x128xbf16>, vector<128x128xbf16>, vector<2x128xf32> -> vector<2x128xf32>
    %c0_19 = arith.constant 0 : index
    %c0_20 = arith.constant 0 : index
    %38 = vector.load %arg7[%c0_19, %c0_20] : memref<1x128xf32, #tpu.memory_space<vmem>>, vector<1x128xf32>
    %39 = vector.broadcast %38 : vector<1x128xf32> to vector<2x128xf32>
    %40 = arith.addf %37, %39 : vector<2x128xf32>
    %cst_21 = arith.constant 4.471500e-02 : f32
    %41 = vector.broadcast %cst_21 : f32 to vector<2x128xf32>
    %42 = arith.mulf %41, %40 : vector<2x128xf32>
    %43 = arith.mulf %42, %40 : vector<2x128xf32>
    %44 = arith.mulf %43, %40 : vector<2x128xf32>
    %45 = arith.addf %40, %44 : vector<2x128xf32>
    %cst_22 = arith.constant 0.797884583 : f32
    %46 = vector.broadcast %cst_22 : f32 to vector<2x128xf32>
    %47 = arith.mulf %46, %45 : vector<2x128xf32>
    %cst_23 = arith.constant 5.000000e-01 : f32
    %48 = vector.broadcast %cst_23 : f32 to vector<2x128xf32>
    %49 = arith.mulf %48, %40 : vector<2x128xf32>
    %50 = math.tanh %47 : vector<2x128xf32>
    %cst_24 = arith.constant 1.000000e+00 : f32
    %51 = vector.broadcast %cst_24 : f32 to vector<2x128xf32>
    %52 = arith.addf %51, %50 : vector<2x128xf32>
    %53 = arith.mulf %49, %52 : vector<2x128xf32>
    %54 = arith.truncf %53 : vector<2x128xf32> to vector<2x128xbf16>
    %c0_25 = arith.constant 0 : index
    %c0_26 = arith.constant 0 : index
    %55 = vector.load %arg8[%c0_25, %c0_26] : memref<128x128xbf16, #tpu.memory_space<vmem>>, vector<128x128xbf16>
    %cst_27 = arith.constant dense<0.000000e+00> : vector<2x128xf32>
    %56 = tpu.matmul %54, %55, %cst_27 {dimension_numbers = #tpu.dot_dimension_numbers<[1], [0], [0], [1], [0, 0, 1, 1], [], []>} : vector<2x128xbf16>, vector<128x128xbf16>, vector<2x128xf32> -> vector<2x128xf32>
    %c0_28 = arith.constant 0 : index
    %c0_29 = arith.constant 0 : index
    %57 = vector.load %arg9[%c0_28, %c0_29] : memref<1x128xf32, #tpu.memory_space<vmem>>, vector<1x128xf32>
    %58 = vector.broadcast %57 : vector<1x128xf32> to vector<2x128xf32>
    %59 = arith.addf %56, %58 : vector<2x128xf32>
    %60 = vector.extract_strided_slice %59 {offsets = [0, 6], sizes = [2, 1], strides = [1, 1]} : vector<2x128xf32> to vector<2x1xf32>
    %61 = vector.extract_strided_slice %59 {offsets = [0, 7], sizes = [2, 1], strides = [1, 1]} : vector<2x128xf32> to vector<2x1xf32>
    %62 = arith.subf %60, %61 : vector<2x1xf32>
    %63 = vector.broadcast %62 : vector<2x1xf32> to vector<2x128xf32>
    %64 = arith.addf %59, %63 : vector<2x128xf32>
    %c0_30 = arith.constant 0 : index
    %c0_31 = arith.constant 0 : index
    %65 = vector.load %arg10[%c0_30, %c0_31] : memref<2x128xf32, #tpu.memory_space<vmem>>, vector<2x128xf32>
    tpu.vector_store %arg10[%c0_30, %c0_31], %64 {strides = array<i32>} : memref<2x128xf32, #tpu.memory_space<vmem>>, vector<2x128xf32>,
    return
  }
  func.func @transform_0(%arg0: i32) -> (i32, i32) {
    %c0_i32 = arith.constant 0 : i32
    %c0_i32_0 = arith.constant 0 : i32
    return %arg0, %c0_i32 : i32, i32
  }
  func.func @transform_1(%arg0: i32) -> (i32, i32) {
    %c0_i32 = arith.constant 0 : i32
    %c0_i32_0 = arith.constant 0 : i32
    %c0_i32_1 = arith.constant 0 : i32
    return %c0_i32, %c0_i32_0 : i32, i32
  }
  func.func @transform_2(%arg0: i32) -> (i32, i32) {
    %c0_i32 = arith.constant 0 : i32
    %c0_i32_0 = arith.constant 0 : i32
    %c0_i32_1 = arith.constant 0 : i32
    return %c0_i32, %c0_i32_0 : i32, i32
  }
  func.func @transform_3(%arg0: i32) -> (i32, i32) {
    %c0_i32 = arith.constant 0 : i32
    %c0_i32_0 = arith.constant 0 : i32
    %c0_i32_1 = arith.constant 0 : i32
    return %c0_i32, %c0_i32_0 : i32, i32
  }
  func.func @transform_4(%arg0: i32) -> (i32, i32) {
    %c0_i32 = arith.constant 0 : i32
    %c0_i32_0 = arith.constant 0 : i32
    %c0_i32_1 = arith.constant 0 : i32
    return %c0_i32, %c0_i32_0 : i32, i32
  }
  func.func @transform_5(%arg0: i32) -> (i32, i32) {
    %c0_i32 = arith.constant 0 : i32
    %c0_i32_0 = arith.constant 0 : i32
    %c0_i32_1 = arith.constant 0 : i32
    return %c0_i32, %c0_i32_0 : i32, i32
  }
  func.func @transform_6(%arg0: i32) -> (i32, i32) {
    %c0_i32 = arith.constant 0 : i32
    %c0_i32_0 = arith.constant 0 : i32
    %c0_i32_1 = arith.constant 0 : i32
    return %c0_i32, %c0_i32_0 : i32, i32
  }
  func.func @transform_7(%arg0: i32) -> (i32, i32) {
    %c0_i32 = arith.constant 0 : i32
    %c0_i32_0 = arith.constant 0 : i32
    %c0_i32_1 = arith.constant 0 : i32
    return %c0_i32, %c0_i32_0 : i32, i32
  }
  func.func @transform_8(%arg0: i32) -> (i32, i32) {
    %c0_i32 = arith.constant 0 : i32
    %c0_i32_0 = arith.constant 0 : i32
    %c0_i32_1 = arith.constant 0 : i32
    return %c0_i32, %c0_i32_0 : i32, i32
  }
  func.func @transform_9(%arg0: i32) -> (i32, i32) {
    %c0_i32 = arith.constant 0 : i32
    %c0_i32_0 = arith.constant 0 : i32
    return %arg0, %c0_i32 : i32, i32
  }
}

</mosaic_0001>

<llo_original>
// kernel: _lambda_.1
$region0: #{_lambda_.1}
  #allocation0 [shape = 'u32[]', space=smem, size = 0x4, offset = 0x4, fixed_abs, tag = 'smem constant byte address 0x4 - core index']
  #allocation1 [shape = 'u32[144,128]{1,0:T(1,128)}', space=vmem, size = 0x12000, scoped, tag = 'internal scratch']
  %s0 = inlined_call_operand.vmem [shape: f32[2,16], index: 0, kind: input, shape index: {}]
  %s1 = inlined_call_operand.vmem [shape: bf16[16,128], index: 1, kind: input, shape index: {}]
  %s2 = inlined_call_operand.vmem [shape: f32[1,128], index: 2, kind: input, shape index: {}, may-alias: {2,4,6,8}]
  %s3 = inlined_call_operand.vmem [shape: f32[1,128], index: 3, kind: input, shape index: {}]
  %s4 = inlined_call_operand.vmem [shape: f32[1,128], index: 4, kind: input, shape index: {}, may-alias: {2,4,6,8}]
  %s5 = inlined_call_operand.hbm [shape: bf16[128,128], index: 5, kind: input, shape index: {}]
  %s6 = inlined_call_operand.vmem [shape: f32[1,128], index: 6, kind: input, shape index: {}, may-alias: {2,4,6,8}]
  %s7 = inlined_call_operand.hbm [shape: bf16[128,128], index: 7, kind: input, shape index: {}]
  %s8 = inlined_call_operand.vmem [shape: f32[1,128], index: 8, kind: input, shape index: {}, may-alias: {2,4,6,8}]
  %s9 = inlined_call_operand.hbm [shape: f32[2,128], index: 9, kind: output, shape index: {}]
  %s10 = sld [smem:[#allocation0]]
  $region54: #{_lambda_.1} parent=0
    _
  %s12 = ssub.s32 1, %s10
  %s13 = scalar_select 0, %s12, %s10
  $region1: #{_lambda_.1} parent=0
    #allocation2 [shape = 'u8[32768]{0}', space=vmem, size = 0x8000, scoped, tag = 'input window, operand 5, single buffered']
    #allocation3 [shape = 's32[1]{0}', space=sflag, size = 0x4, scoped, tag = 'scoped memory for _lambda_.1']
    #allocation4 [shape = 's32[1]{0}', space=sflag, size = 0x4, scoped, tag = 'scoped memory for _lambda_.1']
    #allocation5 [shape = 'u8[32768]{0}', space=vmem, size = 0x8000, scoped, tag = 'input window, operand 7, single buffered']
    #allocation6 [shape = 's32[1]{0}', space=sflag, size = 0x4, scoped, tag = 'scoped memory for _lambda_.1']
    #allocation7 [shape = 'u8[1024]{0}', space=vmem, size = 0x400, scoped, tag = 'output window, operand 0, single buffered']
    %14 = vsyncpa [#allocation3], 0
    %15 = vsyncpa [#allocation6], 0
    %16 = vsyncpa [#allocation4], 0
    // Predicated region
    $region2: #{_lambda_.1} parent=1 // pred_check
      _
    $region3: #{_lambda_.1} parent=1 // pred_check_branch
      %18 = sbr.rel (0) target = $region5
    $region4: #{_lambda_.1} parent=1 // pred_region
      _
    $region5: #{_lambda_.1} parent=1 // pred_fallthru
      _
    // Predicated region
    $region6: #{_lambda_.1} parent=1 // pred_check
      _
    $region7: #{_lambda_.1} parent=1 // pred_check_branch
      %20 = sbr.rel (0) target = $region9
    $region8: #{_lambda_.1} parent=1 // pred_region
      _
    $region9: #{_lambda_.1} parent=1 // pred_fallthru
      _
    // Predicated region
    $region10: #{_lambda_.1} parent=1 // pred_check
      _
    $region11: #{_lambda_.1} parent=1 // pred_check_branch
      %22 = sbr.rel (0) target = $region13
    $region12: #{_lambda_.1} parent=1 // pred_region
      _
    $region13: #{_lambda_.1} parent=1 // pred_fallthru
      _
    // Predicated region
    $region14: #{_lambda_.1} parent=1 // pred_check
      _
    $region15: #{_lambda_.1} parent=1 // pred_check_branch
      %24 = sbr.rel (0) target = $region17
    $region16: #{_lambda_.1} parent=1 // pred_region
      _
    $region17: #{_lambda_.1} parent=1 // pred_fallthru
      _
    // Predicated region
    $region18: #{_lambda_.1} parent=1 // pred_check
      _
    $region19: #{_lambda_.1} parent=1 // pred_check_branch
      %26 = sbr.rel (0) target = $region21
    $region20: #{_lambda_.1} parent=1 // pred_region
      _
    $region21: #{_lambda_.1} parent=1 // pred_fallthru
      _
    // Predicated region
    $region22: #{_lambda_.1} parent=1 // pred_check
      _
    $region23: #{_lambda_.1} parent=1 // pred_check_branch
      %28 = sbr.rel (0) target = $region25
    $region24: #{_lambda_.1} parent=1 // pred_region
      %s30 = ssub.s32 1024, 1024
      %31 = vsyncadd [#allocation3], %s30
      %s32 = sshll.u32 [#allocation2], 4
      %s33 = int_to_ptr.vmem [resolvable:$true] %s32
      %38 = dma.hbm_to_vmem [thread:$0]  %s5, 1024, %s33, [#allocation3], 64, 64, 4
    $region25: #{_lambda_.1} parent=1 // pred_fallthru
      _
    // Predicated region
    $region26: #{_lambda_.1} parent=1 // pred_check
      _
    $region27: #{_lambda_.1} parent=1 // pred_check_branch
      %40 = sbr.rel (0) target = $region29
    $region28: #{_lambda_.1} parent=1 // pred_region
      _
    $region29: #{_lambda_.1} parent=1 // pred_fallthru
      _
    // Predicated region
    $region30: #{_lambda_.1} parent=1 // pred_check
      _
    $region31: #{_lambda_.1} parent=1 // pred_check_branch
      %42 = sbr.rel (0) target = $region33
    $region32: #{_lambda_.1} parent=1 // pred_region
      %s44 = ssub.s32 1024, 1024
      %45 = vsyncadd [#allocation6], %s44
      %s46 = sshll.u32 [#allocation5], 4
      %s47 = int_to_ptr.vmem [resolvable:$true] %s46
      %52 = dma.hbm_to_vmem [thread:$0]  %s7, 1024, %s47, [#allocation6], 64, 64, 4
    $region33: #{_lambda_.1} parent=1 // pred_fallthru
      _
    // Predicated region
    $region34: #{_lambda_.1} parent=1 // pred_check
      _
    $region35: #{_lambda_.1} parent=1 // pred_check_branch
      %54 = sbr.rel (0) target = $region37
    $region36: #{_lambda_.1} parent=1 // pred_region
      _
    $region37: #{_lambda_.1} parent=1 // pred_fallthru
      _
    // Predicated region
    $region38: #{_lambda_.1} parent=1 // pred_check
      _
    $region39: #{_lambda_.1} parent=1 // pred_check_branch
      %56 = sbr.rel (0) target = $region41
    $region40: #{_lambda_.1} parent=1 // pred_region
      %57 = dma.done [#allocation3], 1024
    $region41: #{_lambda_.1} parent=1 // pred_fallthru
      _
    // Predicated region
    $region42: #{_lambda_.1} parent=1 // pred_check
      _
    $region43: #{_lambda_.1} parent=1 // pred_check_branch
      %59 = sbr.rel (0) target = $region45
    $region44: #{_lambda_.1} parent=1 // pred_region
      %60 = dma.done [#allocation6], 1024
    $region45: #{_lambda_.1} parent=1 // pred_fallthru
      _
    %v62 = vld [vmem:[%s0] sm:$0x3]
    %v63 = vpack.c.bf16 %v62, %v62
    %v64 = vld [vmem:[%s1] sm:$0xf]
    %v65 = vld [vmem:[%s1 + $0x4] sm:$0xf]
    %v66 = vld [vmem:[%s2] sm:$0x1]
    %v68 = vlaneseq
    %v69 = vshrl.u32 %v68, 7
    %v70 = vsub.s32 0, %v69
    %v71 = vrot.slane %v66, %v70
    %v75 = vunpack.c.l.b16 %v64
    %v76 = vunpack.c.l.b16 %v65
    %v77 = vpack.c.b16 %v76, %v75
    %vm79 = vcmask 130048
    %v81 = vsel %vm79, %v63, 0
    %83 = vmatprep.subr.bf16.mxu0 0
    %84 = vmatpush1.bf16.msra.mxu0 %v77
    %85 = vmatprep.subr.bf16.mxu0 0
    %86 = vmatpush1.bf16.msra.mxu0 0
    %87 = vmatprep.subr.bf16.mxu0 0
    %88 = vmatpush1.bf16.msra.mxu0 0
    %89 = vmatprep.subr.bf16.mxu0 0
    %90 = vmatpush1.bf16.msra.mxu0 0
    %91 = vmatprep.subr.bf16.mxu0 0
    %92 = vmatpush1.bf16.msra.mxu0 0
    %93 = vmatprep.subr.bf16.mxu0 0
    %94 = vmatpush1.bf16.msra.mxu0 0
    %95 = vmatprep.subr.bf16.mxu0 0
    %96 = vmatpush1.bf16.msra.mxu0 0
    %97 = vmatprep.subr.bf16.mxu0 0
    %98 = vmatpush1.bf16.msra.mxu0 0
    %99 = vmatprep.subr.bf16.mxu0 0
    %100 = vmatpush1.bf16.msra.mxu0 0
    %101 = vmatprep.subr.bf16.mxu0 0
    %102 = vmatpush1.bf16.msra.mxu0 0
    %103 = vmatprep.subr.bf16.mxu0 0
    %104 = vmatpush1.bf16.msra.mxu0 0
    %105 = vmatprep.subr.bf16.mxu0 0
    %106 = vmatpush1.bf16.msra.mxu0 0
    %107 = vmatprep.subr.bf16.mxu0 0
    %108 = vmatpush1.bf16.msra.mxu0 0
    %109 = vmatprep.subr.bf16.mxu0 0
    %110 = vmatpush1.bf16.msra.mxu0 0
    %111 = vmatprep.subr.bf16.mxu0 0
    %112 = vmatpush1.bf16.msra.mxu0 0
    %113 = vmatprep.subr.bf16.mxu0 0
    %114 = vmatpush1.bf16.msra.mxu0 0
    %115 = vmatprep.mubr.bf16.mxu0 0
    %116 = vmatmul.mubr.bf16.gmra.mrb[0].mxu0 %v81
    %v117 = vpop.f32.mrb[0].mxu0
    %v118 = vadd.f32 %v71, %v117
    %v119 = vpop.f32.mrb[0].mxu0
    %v120 = vpop.f32.mrb[0].mxu0
    %v121 = vpop.f32.mrb[0].mxu0
    %122 = vdwg.mxu0
    %v123 = vmax.f32 %v118, 0.0
    %vm124 = vcmask 1041408
    %v125 = vsel %vm124, %v123, 0.0
    %126 = vadd.xlane.f32.xlu0 %v125
    %v127 = vpop.xlane.xlu0 %126
    %v128 = vmul.f32 %v127, 0.008333334
    %v129 = vmul.f32 %v123, %v123
    %v130 = vsel %vm124, %v129, 0.0
    %131 = vadd.xlane.f32.xlu0 %v130
    %v132 = vpop.xlane.xlu0 %131
    %v133 = vmul.f32 %v132, 0.008333334
    %v134 = vmul.f32 %v128, %v128
    %v135 = vsub.f32 %v133, %v134
    %v136 = vmax.f32 %v135, 0.0
    %v137 = vsub.f32 %v123, %v128
    %v138 = vadd.f32 %v136, 1e-05
    %v139 = vrsqrt.pop %v138
    %v140 = vmul.f32 %v137, %v139
    %v141 = vld [vmem:[%s3] sm:$0x1]
    %v143 = vlaneseq
    %v144 = vshrl.u32 %v143, 7
    %v145 = vsub.s32 0, %v144
    %v146 = vrot.slane %v141, %v145
    %v148 = vmul.f32 %v140, %v146
    %v149 = vld [vmem:[%s4] sm:$0x1]
    %v151 = vlaneseq
    %v152 = vshrl.u32 %v151, 7
    %v153 = vsub.s32 0, %v152
    %v154 = vrot.slane %v149, %v153
    %v156 = vadd.f32 %v148, %v154
    %v157 = vpack.c.bf16 %v156, %v156
    %v158 = vld [vmem:[#allocation2] sm:$0xf]
    %v159 = vld [vmem:[#allocation2 + $0x4] sm:$0xf]
    %v160 = vld [vmem:[#allocation2 + $0x8] sm:$0xf]
    %v161 = vld [vmem:[#allocation2 + $0xc] sm:$0xf]
    %v162 = vld [vmem:[#allocation2 + $0x10] sm:$0xf]
    %v163 = vld [vmem:[#allocation2 + $0x14] sm:$0xf]
    %v164 = vld [vmem:[#allocation2 + $0x18] sm:$0xf]
    %v165 = vld [vmem:[#allocation2 + $0x1c] sm:$0xf]
    %v166 = vld [vmem:[#allocation2 + $0x20] sm:$0xf]
    %v167 = vld [vmem:[#allocation2 + $0x24] sm:$0xf]
    %v168 = vld [vmem:[#allocation2 + $0x28] sm:$0xf]
    %v169 = vld [vmem:[#allocation2 + $0x2c] sm:$0xf]
    %v170 = vld [vmem:[#allocation2 + $0x30] sm:$0xf]
    %v171 = vld [vmem:[#allocation2 + $0x34] sm:$0xf]
    %v172 = vld [vmem:[#allocation2 + $0x38] sm:$0xf]
    %v173 = vld [vmem:[#allocation2 + $0x3c] sm:$0xf]
    %v174 = vld [vmem:[%s6] sm:$0x1]
    %v176 = vlaneseq
    %v177 = vshrl.u32 %v176, 7
    %v178 = vsub.s32 0, %v177
    %v179 = vrot.slane %v174, %v178
    %v197 = vunpack.c.l.b16 %v158
    %v198 = vunpack.c.l.b16 %v159
    %v199 = vunpack.c.l.b16 %v160
    %v200 = vunpack.c.l.b16 %v161
    %v201 = vunpack.c.l.b16 %v162
    %v202 = vunpack.c.l.b16 %v163
    %v203 = vunpack.c.l.b16 %v164
    %v204 = vunpack.c.l.b16 %v165
    %v205 = vunpack.c.l.b16 %v166
    %v206 = vunpack.c.l.b16 %v167
    %v207 = vunpack.c.l.b16 %v168
    %v208 = vunpack.c.l.b16 %v169
    %v209 = vunpack.c.l.b16 %v170
    %v210 = vunpack.c.l.b16 %v171
    %v211 = vunpack.c.l.b16 %v172
    %v212 = vunpack.c.l.b16 %v173
    %v213 = vpack.c.b16 %v198, %v197
    %v214 = vpack.c.b16 %v200, %v199
    %v215 = vpack.c.b16 %v202, %v201
    %v216 = vpack.c.b16 %v204, %v203
    %v217 = vpack.c.b16 %v206, %v205
    %v218 = vpack.c.b16 %v208, %v207
    %v219 = vpack.c.b16 %v210, %v209
    %v220 = vpack.c.b16 %v212, %v211
    %229 = vmatprep.subr.bf16.mxu0 0
    %230 = vmatpush1.bf16.msra.mxu0 %v213
    %231 = vmatprep.subr.bf16.mxu0 0
    %232 = vmatpush1.bf16.msra.mxu0 %v214
    %233 = vmatprep.subr.bf16.mxu0 0
    %234 = vmatpush1.bf16.msra.mxu0 %v215
    %235 = vmatprep.subr.bf16.mxu0 0
    %236 = vmatpush1.bf16.msra.mxu0 %v216
    %237 = vmatprep.subr.bf16.mxu0 0
    %238 = vmatpush1.bf16.msra.mxu0 %v217
    %239 = vmatprep.subr.bf16.mxu0 0
    %240 = vmatpush1.bf16.msra.mxu0 %v218
    %241 = vmatprep.subr.bf16.mxu0 0
    %242 = vmatpush1.bf16.msra.mxu0 %v219
    %243 = vmatprep.subr.bf16.mxu0 0
    %244 = vmatpush1.bf16.msra.mxu0 %v220
    %245 = vmatprep.subr.bf16.mxu0 0
    %246 = vmatpush1.bf16.msra.mxu0 0
    %247 = vmatprep.subr.bf16.mxu0 0
    %248 = vmatpush1.bf16.msra.mxu0 0
    %249 = vmatprep.subr.bf16.mxu0 0
    %250 = vmatpush1.bf16.msra.mxu0 0
    %251 = vmatprep.subr.bf16.mxu0 0
    %252 = vmatpush1.bf16.msra.mxu0 0
    %253 = vmatprep.subr.bf16.mxu0 0
    %254 = vmatpush1.bf16.msra.mxu0 0
    %255 = vmatprep.subr.bf16.mxu0 0
    %256 = vmatpush1.bf16.msra.mxu0 0
    %257 = vmatprep.subr.bf16.mxu0 0
    %258 = vmatpush1.bf16.msra.mxu0 0
    %259 = vmatprep.subr.bf16.mxu0 0
    %260 = vmatpush1.bf16.msra.mxu0 0
    %261 = vmatprep.mubr.bf16.mxu0 0
    %262 = vmatmul.mubr.bf16.gmra.mrb[0].mxu0 %v157
    %v263 = vpop.f32.mrb[0].mxu0
    %v264 = vadd.f32 %v179, %v263
    %v265 = vpop.f32.mrb[0].mxu0
    %v266 = vpop.f32.mrb[0].mxu0
    %v267 = vpop.f32.mrb[0].mxu0
    %268 = vdwg.mxu0
    %v269 = vmul.f32 %v264, 0.044715
    %v270 = vmul.f32 %v269, %v264
    %v271 = vmul.f32 %v270, %v264
    %v272 = vadd.f32 %v264, %v271
    %v273 = vmul.f32 %v272, 0.7978846
    %v274 = vmul.f32 %v264, 0.5
    %v275 = vtanh.pop %v273
    %v276 = vadd.f32 %v275, 1.0
    %v277 = vmul.f32 %v274, %v276
    %v278 = vpack.c.bf16 %v277, %v277
    %v279 = vld [vmem:[#allocation5] sm:$0xf]
    %v280 = vld [vmem:[#allocation5 + $0x4] sm:$0xf]
    %v281 = vld [vmem:[#allocation5 + $0x8] sm:$0xf]
    %v282 = vld [vmem:[#allocation5 + $0xc] sm:$0xf]
    %v283 = vld [vmem:[#allocation5 + $0x10] sm:$0xf]
    %v284 = vld [vmem:[#allocation5 + $0x14] sm:$0xf]
    %v285 = vld [vmem:[#allocation5 + $0x18] sm:$0xf]
    %v286 = vld [vmem:[#allocation5 + $0x1c] sm:$0xf]
    %v287 = vld [vmem:[#allocation5 + $0x20] sm:$0xf]
    %v288 = vld [vmem:[#allocation5 + $0x24] sm:$0xf]
    %v289 = vld [vmem:[#allocation5 + $0x28] sm:$0xf]
    %v290 = vld [vmem:[#allocation5 + $0x2c] sm:$0xf]
    %v291 = vld [vmem:[#allocation5 + $0x30] sm:$0xf]
    %v292 = vld [vmem:[#allocation5 + $0x34] sm:$0xf]
    %v293 = vld [vmem:[#allocation5 + $0x38] sm:$0xf]
    %v294 = vld [vmem:[#allocation5 + $0x3c] sm:$0xf]
    %v295 = vld [vmem:[%s8] sm:$0x1]
    %v297 = vlaneseq
    %v298 = vshrl.u32 %v297, 7
    %v299 = vsub.s32 0, %v298
    %v300 = vrot.slane %v295, %v299
    %v318 = vunpack.c.l.b16 %v279
    %v319 = vunpack.c.l.b16 %v280
    %v320 = vunpack.c.l.b16 %v281
    %v321 = vunpack.c.l.b16 %v282
    %v322 = vunpack.c.l.b16 %v283
    %v323 = vunpack.c.l.b16 %v284
    %v324 = vunpack.c.l.b16 %v285
    %v325 = vunpack.c.l.b16 %v286
    %v326 = vunpack.c.l.b16 %v287
    %v327 = vunpack.c.l.b16 %v288
    %v328 = vunpack.c.l.b16 %v289
    %v329 = vunpack.c.l.b16 %v290
    %v330 = vunpack.c.l.b16 %v291
    %v331 = vunpack.c.l.b16 %v292
    %v332 = vunpack.c.l.b16 %v293
    %v333 = vunpack.c.l.b16 %v294
    %v334 = vpack.c.b16 %v319, %v318
    %v335 = vpack.c.b16 %v321, %v320
    %v336 = vpack.c.b16 %v323, %v322
    %v337 = vpack.c.b16 %v325, %v324
    %v338 = vpack.c.b16 %v327, %v326
    %v339 = vpack.c.b16 %v329, %v328
    %v340 = vpack.c.b16 %v331, %v330
    %v341 = vpack.c.b16 %v333, %v332
    %350 = vmatprep.subr.bf16.mxu0 0
    %351 = vmatpush1.bf16.msra.mxu0 %v334
    %352 = vmatprep.subr.bf16.mxu0 0
    %353 = vmatpush1.bf16.msra.mxu0 %v335
    %354 = vmatprep.subr.bf16.mxu0 0
    %355 = vmatpush1.bf16.msra.mxu0 %v336
    %356 = vmatprep.subr.bf16.mxu0 0
    %357 = vmatpush1.bf16.msra.mxu0 %v337
    %358 = vmatprep.subr.bf16.mxu0 0
    %359 = vmatpush1.bf16.msra.mxu0 %v338
    %360 = vmatprep.subr.bf16.mxu0 0
    %361 = vmatpush1.bf16.msra.mxu0 %v339
    %362 = vmatprep.subr.bf16.mxu0 0
    %363 = vmatpush1.bf16.msra.mxu0 %v340
    %364 = vmatprep.subr.bf16.mxu0 0
    %365 = vmatpush1.bf16.msra.mxu0 %v341
    %366 = vmatprep.subr.bf16.mxu0 0
    %367 = vmatpush1.bf16.msra.mxu0 0
    %368 = vmatprep.subr.bf16.mxu0 0
    %369 = vmatpush1.bf16.msra.mxu0 0
    %370 = vmatprep.subr.bf16.mxu0 0
    %371 = vmatpush1.bf16.msra.mxu0 0
    %372 = vmatprep.subr.bf16.mxu0 0
    %373 = vmatpush1.bf16.msra.mxu0 0
    %374 = vmatprep.subr.bf16.mxu0 0
    %375 = vmatpush1.bf16.msra.mxu0 0
    %376 = vmatprep.subr.bf16.mxu0 0
    %377 = vmatpush1.bf16.msra.mxu0 0
    %378 = vmatprep.subr.bf16.mxu0 0
    %379 = vmatpush1.bf16.msra.mxu0 0
    %380 = vmatprep.subr.bf16.mxu0 0
    %381 = vmatpush1.bf16.msra.mxu0 0
    %382 = vmatprep.mubr.bf16.mxu0 0
    %383 = vmatmul.mubr.bf16.gmra.mrb[0].mxu0 %v278
    %v384 = vpop.f32.mrb[0].mxu0
    %v385 = vadd.f32 %v300, %v384
    %v386 = vpop.f32.mrb[0].mxu0
    %v387 = vpop.f32.mrb[0].mxu0
    %v388 = vpop.f32.mrb[0].mxu0
    %389 = vdwg.mxu0
    %391 = vrot.lane.b32.xlu0 %v385, 127
    %v392 = vpop.permute.xlu0 %391
    %v394 = vsub.f32 %v385, %v392
    %396 = vset.pattern.permute.xlu0 6
    %397 = vperm.xlu0 %396, %v394
    %v398 = vpop.permute.xlu0 %397
    %v400 = vadd.f32 %v385, %v398
    %401 = vst [vmem:[#allocation7] sm:$0x3] %v400
    // Predicated region
    $region46: #{_lambda_.1} parent=1 // pred_check
      _
    $region47: #{_lambda_.1} parent=1 // pred_check_branch
      %403 = sbr.rel (0) target = $region49
    $region48: #{_lambda_.1} parent=1 // pred_region
      %s405 = ssub.s32 32, 32
      %406 = vsyncadd [#allocation4], %s405
      %s408 = sshll.u32 [#allocation7], 4
      %s409 = int_to_ptr.vmem [resolvable:$true] %s408
      %411 = dma.vmem_to_hbm [thread:$0]  %s409, 32, %s9, [#allocation4]
    $region49: #{_lambda_.1} parent=1 // pred_fallthru
      _
    // Predicated region
    $region50: #{_lambda_.1} parent=1 // pred_check
      _
    $region51: #{_lambda_.1} parent=1 // pred_check_branch
      %413 = sbr.rel (0) target = $region53
    $region52: #{_lambda_.1} parent=1 // pred_region
      %414 = dma.done [#allocation4], 32
    $region53: #{_lambda_.1} parent=1 // pred_fallthru
      _
    %415 = vsyncpa [#allocation3], 1
    %416 = vsyncpa [#allocation6], 1
    %417 = vsyncpa [#allocation4], 1

</llo_original>
